<compile_context>
chip_gen: v6e
topology: v6e:2x2x1
jax: 0.10.0
libtpu: 0.0.40
codegen_flags: <defaults>
</compile_context>

<pallas_src>
import functools

import jax
import jax.numpy as jnp
from jax.experimental import pallas as pl
from jax.experimental.pallas import tpu as pltpu

LANE = 128
ROW_TILE = 16      # bf16 packs 16 rows per vreg -> keep row tiles multiples of 16
TM_CAP = 512       # large M tiles fill the MXU M axis and amortize per-step overhead


def _round_up(x, m):
    return ((x + m - 1) // m) * m


def _choose_row_tile(batch):
    """Pick (TM, B_pad): TM a multiple of 16, <= TM_CAP, minimizing batch padding,
    preferring >= 2 grid steps (v7x 2-TensorCore sharding), then the largest TM."""
    b_min = _round_up(batch, ROW_TILE)
    if b_min <= ROW_TILE:
        return ROW_TILE, ROW_TILE   # tiny batch: single tile; weight-DMA/overhead bound
    best_key, best_tm, best_pad = None, None, None
    for tm in range(ROW_TILE, min(TM_CAP, b_min) + 1, ROW_TILE):
        b_pad = _round_up(batch, tm)
        steps = b_pad // tm
        key = (b_pad - batch, 0 if steps >= 2 else 1, -tm)
        if best_key is None or key < best_key:
            best_key, best_tm, best_pad = key, tm, b_pad
    return best_tm, best_pad


def _default_epilogue_dtype():
    """bf16 elementwise epilogue on chips with bf16 VALUs (v6e/v7x); f32 otherwise."""
    try:
        kind = jax.devices()[0].device_kind.lower()
    except Exception:
        return jnp.float32
    if any(v in kind for v in ("v2", "v3", "v4", "v5")):
        return jnp.float32
    return jnp.bfloat16


def fc_mask_kernel(x_ref, w1_ref, b1_ref, w2_ref, b2_ref, w3_ref, b3_ref, out_ref,
                   *, epilogue_dtype):
    # Masks are pre-folded into the bf16 weights; kernel = 3 matmuls + bias + ReLU.
    x = x_ref[...]                                                     # (TM, D) bf16

    h1 = jnp.dot(x, w1_ref[...], preferred_element_type=jnp.float32)  # MXU, f32 acc
    h1 = jnp.maximum(h1.astype(epilogue_dtype) + b1_ref[...].astype(epilogue_dtype), 0.0)

    h2 = jnp.dot(h1.astype(jnp.bfloat16), w2_ref[...],
                 preferred_element_type=jnp.float32)
    h2 = jnp.maximum(h2.astype(epilogue_dtype) + b2_ref[...].astype(epilogue_dtype), 0.0)

    out = jnp.dot(h2.astype(jnp.bfloat16), w3_ref[...],
                  preferred_element_type=jnp.float32)                 # (TM, C_pad)
    out = out + b3_ref[...]                                           # f32 final bias
    out_ref[...] = out.astype(out_ref.dtype)                          # bf16 lane-dense store


def prepare_kernel_params(p):
    """One-time preprocessing (NOT per-call): fold masks into weights, cast matmul
    operands to bf16, zero-pad the final layer to a lane-dense width.
    NOTE: must be re-run if masks/weights are updated (training / mask scheduling)."""
    w1 = (p["mask0"].T * p["w1"]).astype(jnp.bfloat16)   # (D, H1)  rows scaled by mask0
    w2 = (p["mask1"].T * p["w2"]).astype(jnp.bfloat16)   # (H1, H2) rows scaled by mask1
    w3 = (p["mask2"].T * p["w3"]).astype(jnp.bfloat16)   # (H2, C)  rows scaled by mask2
    C = w3.shape[1]
    C_pad = _round_up(C, LANE)
    w3 = jnp.pad(w3, ((0, 0), (0, C_pad - C)))
    b3 = jnp.pad(p["b3"].astype(jnp.float32), ((0, 0), (0, C_pad - C)))
    return {
        "w1": w1, "b1": p["b1"].astype(jnp.float32),
        "w2": w2, "b2": p["b2"].astype(jnp.float32),
        "w3": w3, "b3": b3,
        "num_classes": C,
    }


def fc_mask_forward(x_nchw, kp, epilogue_dtype=None):
    """x_nchw: (B, C, H, W) float32. kp: output of prepare_kernel_params."""
    if epilogue_dtype is None:
        epilogue_dtype = _default_epilogue_dtype()

    B = x_nchw.shape[0]
    w1, b1, w2, b2, w3, b3 = kp["w1"], kp["b1"], kp["w2"], kp["b2"], kp["w3"], kp["b3"]
    D, H1 = w1.shape
    H2, C_pad = w3.shape
    C = kp["num_classes"]

    # Flatten exactly like torch .view(B, -1) (row-major over C, H, W); cast to bf16
    # once in the wrapper so the HBM->VMEM x stream is half the bytes.
    x2d = x_nchw.reshape(B, D).astype(jnp.bfloat16)

    TM, B_pad = _choose_row_tile(B)
    if B_pad != B:
        x2d = jnp.pad(x2d, ((0, B_pad - B), (0, 0)))

    resident = lambda i: (0, 0)   # weights/biases stay in VMEM across the batch grid

    flops = 2 * B_pad * (D * H1 + H1 * H2 + H2 * C_pad)
    bytes_accessed = (x2d.size * 2                                # bf16 x stream
                      + (w1.size + w2.size + w3.size) * 2         # bf16 weights (once)
                      + (b1.size + b2.size + b3.size) * 4
                      + B_pad * C_pad * 2)                        # bf16 output writeback

    kernel = functools.partial(fc_mask_kernel, epilogue_dtype=epilogue_dtype)

    out = pl.pallas_call(
        kernel,
        out_shape=jax.ShapeDtypeStruct((B_pad, C_pad), jnp.bfloat16),
        grid_spec=pltpu.PrefetchScalarGridSpec(
            num_scalar_prefetch=0,
            grid=(B_pad // TM,),
            in_specs=[
                pl.BlockSpec((TM, D), lambda i: (i, 0)),   # x tile, pipelined
                pl.BlockSpec((D, H1), resident),
                pl.BlockSpec((1, H1), resident),
                pl.BlockSpec((H1, H2), resident),
                pl.BlockSpec((1, H2), resident),
                pl.BlockSpec((H2, C_pad), resident),
                pl.BlockSpec((1, C_pad), resident),
            ],
            out_specs=pl.BlockSpec((TM, C_pad), lambda i: (i, 0)),
        ),
        compiler_params=pltpu.CompilerParams(
            dimension_semantics=("parallel",)),
        cost_estimate=pl.CostEstimate(
            flops=flops, transcendentals=0, bytes_accessed=bytes_accessed),
    )(x2d, w1, b1, w2, b2, w3, b3)

    # Strip batch and class padding; return f32 logits.
    return out[:B, :C].astype(jnp.float32)


def make_params(key, D, H1, H2, C):
    """Deterministic synthetic FC_Mask parameters. Linear weights stored as (in, out)."""
    ks = jax.random.split(key, 9)
    scale = 0.05
    return {
        # masks (nn.ParameterList entries); kept 2D (1, N)
        "mask0": jax.random.uniform(ks[0], (1, D), jnp.float32),
        "mask1": jax.random.uniform(ks[1], (1, H1), jnp.float32),
        "mask2": jax.random.uniform(ks[2], (1, H2), jnp.float32),
        # Linear layers (PyTorch weight (out, in) pre-transposed to (in, out))
        "w1": scale * jax.random.normal(ks[3], (D, H1), jnp.float32),
        "b1": scale * jax.random.normal(ks[4], (1, H1), jnp.float32),
        "w2": scale * jax.random.normal(ks[5], (H1, H2), jnp.float32),
        "b2": scale * jax.random.normal(ks[6], (1, H2), jnp.float32),
        "w3": scale * jax.random.normal(ks[7], (H2, C), jnp.float32),
        "b3": scale * jax.random.normal(ks[8], (1, C), jnp.float32),
    }


def fc_mask_reference(x_nchw, p):
    """Pure-JAX f32 reference mirroring FC_Mask.forward semantics (masks unfolded)."""
    B = x_nchw.shape[0]
    x = x_nchw.reshape(B, -1) * p["mask0"]
    h1 = jnp.maximum(x @ p["w1"] + p["b1"], 0.0) * p["mask1"]
    h2 = jnp.maximum(h1 @ p["w2"] + p["b2"], 0.0) * p["mask2"]
    return h2 @ p["w3"] + p["b3"]


if __name__ == "__main__":
    # Small shapes consistent with the module: flatten(NCHW) -> masked MLP classifier.
    B, Cin, H, W = 2, 4, 16, 16
    D = Cin * H * W          # 1024 flattened features
    H1, H2, NUM_CLASSES = 256, 128, 10

    key = jax.random.PRNGKey(0)
    kx, kp = jax.random.split(key)
    x = jax.random.normal(kx, (B, Cin, H, W), jnp.float32)
    params = make_params(kp, D, H1, H2, NUM_CLASSES)

    kparams = prepare_kernel_params(params)   # one-time: fold masks, bf16, pad C
    out = fc_mask_forward(x, kparams)
    out = jax.block_until_ready(out)

    ref = fc_mask_reference(x, params)
    assert out.shape == (B, NUM_CLASSES)
    # bf16 inputs/operands/output with f32 MXU accumulation -> bf16-level tolerance vs f32 ref.
    assert jnp.allclose(out, ref, atol=3e-2, rtol=3e-2), "mismatch vs reference"

    print("KERNEL_OK")
</pallas_src>

<mosaic_0001>
module attributes {stable_mosaic.version = 11 : i64} {
  func.func @fc_mask_kernel(%arg0: i32, %arg1: memref<16x1024xbf16, #tpu.memory_space<vmem>>, %arg2: memref<1024x256xbf16, #tpu.memory_space<vmem>>, %arg3: memref<1x256xf32, #tpu.memory_space<vmem>>, %arg4: memref<256x128xbf16, #tpu.memory_space<vmem>>, %arg5: memref<1x128xf32, #tpu.memory_space<vmem>>, %arg6: memref<128x128xbf16, #tpu.memory_space<vmem>>, %arg7: memref<1x128xf32, #tpu.memory_space<vmem>>, %arg8: memref<16x128xbf16, #tpu.memory_space<vmem>>) attributes {dimension_semantics = [#tpu.dimension_semantics<parallel>], iteration_bounds = array<i64: 1>, scalar_prefetch = 0 : i64, scratch_operands = 0 : i64, tpu.core_type = #tpu.core_type<tc>, window_params = [{transform_indices = @transform_0, window_bounds = array<i64: 16, 1024>}, {pipeline_mode = #tpu.pipeline_mode<synchronous>, transform_indices = @transform_1, window_bounds = array<i64: 1024, 256>}, {pipeline_mode = #tpu.pipeline_mode<synchronous>, transform_indices = @transform_2, window_bounds = array<i64: 1, 256>}, {pipeline_mode = #tpu.pipeline_mode<synchronous>, transform_indices = @transform_3, window_bounds = array<i64: 256, 128>}, {pipeline_mode = #tpu.pipeline_mode<synchronous>, transform_indices = @transform_4, window_bounds = array<i64: 1, 128>}, {pipeline_mode = #tpu.pipeline_mode<synchronous>, transform_indices = @transform_5, window_bounds = array<i64: 128, 128>}, {pipeline_mode = #tpu.pipeline_mode<synchronous>, transform_indices = @transform_6, window_bounds = array<i64: 1, 128>}, {transform_indices = @transform_7, window_bounds = array<i64: 16, 128>}]} {
    %c0 = arith.constant 0 : index
    %c0_0 = arith.constant 0 : index
    %0 = vector.load %arg1[%c0, %c0_0] : memref<16x1024xbf16, #tpu.memory_space<vmem>>, vector<16x1024xbf16>
    %c0_1 = arith.constant 0 : index
    %c0_2 = arith.constant 0 : index
    %1 = vector.load %arg2[%c0_1, %c0_2] : memref<1024x256xbf16, #tpu.memory_space<vmem>>, vector<1024x256xbf16>
    %cst = arith.constant dense<0.000000e+00> : vector<16x256xf32>
    %2 = tpu.matmul %0, %1, %cst {dimension_numbers = #tpu.dot_dimension_numbers<[1], [0], [0], [1], [0, 0, 1, 1], [], []>} : vector<16x1024xbf16>, vector<1024x256xbf16>, vector<16x256xf32> -> vector<16x256xf32>
    %3 = arith.truncf %2 : vector<16x256xf32> to vector<16x256xbf16>
    %c0_3 = arith.constant 0 : index
    %c0_4 = arith.constant 0 : index
    %4 = vector.load %arg3[%c0_3, %c0_4] : memref<1x256xf32, #tpu.memory_space<vmem>>, vector<1x256xf32>
    %5 = arith.truncf %4 : vector<1x256xf32> to vector<1x256xbf16>
    %6 = vector.broadcast %5 : vector<1x256xbf16> to vector<16x256xbf16>
    %7 = arith.addf %3, %6 : vector<16x256xbf16>
    %cst_5 = arith.constant 0.000000e+00 : bf16
    %8 = vector.broadcast %cst_5 : bf16 to vector<16x256xbf16>
    %9 = arith.maximumf %7, %8 : vector<16x256xbf16>
    %c0_6 = arith.constant 0 : index
    %c0_7 = arith.constant 0 : index
    %10 = vector.load %arg4[%c0_6, %c0_7] : memref<256x128xbf16, #tpu.memory_space<vmem>>, vector<256x128xbf16>
    %cst_8 = arith.constant dense<0.000000e+00> : vector<16x128xf32>
    %11 = tpu.matmul %9, %10, %cst_8 {dimension_numbers = #tpu.dot_dimension_numbers<[1], [0], [0], [1], [0, 0, 1, 1], [], []>} : vector<16x256xbf16>, vector<256x128xbf16>, vector<16x128xf32> -> vector<16x128xf32>
    %12 = arith.truncf %11 : vector<16x128xf32> to vector<16x128xbf16>
    %c0_9 = arith.constant 0 : index
    %c0_10 = arith.constant 0 : index
    %13 = vector.load %arg5[%c0_9, %c0_10] : memref<1x128xf32, #tpu.memory_space<vmem>>, vector<1x128xf32>
    %14 = arith.truncf %13 : vector<1x128xf32> to vector<1x128xbf16>
    %15 = vector.broadcast %14 : vector<1x128xbf16> to vector<16x128xbf16>
    %16 = arith.addf %12, %15 : vector<16x128xbf16>
    %cst_11 = arith.constant 0.000000e+00 : bf16
    %17 = vector.broadcast %cst_11 : bf16 to vector<16x128xbf16>
    %18 = arith.maximumf %16, %17 : vector<16x128xbf16>
    %c0_12 = arith.constant 0 : index
    %c0_13 = arith.constant 0 : index
    %19 = vector.load %arg6[%c0_12, %c0_13] : memref<128x128xbf16, #tpu.memory_space<vmem>>, vector<128x128xbf16>
    %cst_14 = arith.constant dense<0.000000e+00> : vector<16x128xf32>
    %20 = tpu.matmul %18, %19, %cst_14 {dimension_numbers = #tpu.dot_dimension_numbers<[1], [0], [0], [1], [0, 0, 1, 1], [], []>} : vector<16x128xbf16>, vector<128x128xbf16>, vector<16x128xf32> -> vector<16x128xf32>
    %c0_15 = arith.constant 0 : index
    %c0_16 = arith.constant 0 : index
    %21 = vector.load %arg7[%c0_15, %c0_16] : memref<1x128xf32, #tpu.memory_space<vmem>>, vector<1x128xf32>
    %22 = vector.broadcast %21 : vector<1x128xf32> to vector<16x128xf32>
    %23 = arith.addf %20, %22 : vector<16x128xf32>
    %24 = arith.truncf %23 : vector<16x128xf32> to vector<16x128xbf16>
    %c0_17 = arith.constant 0 : index
    %c0_18 = arith.constant 0 : index
    %25 = vector.load %arg8[%c0_17, %c0_18] : memref<16x128xbf16, #tpu.memory_space<vmem>>, vector<16x128xbf16>
    tpu.vector_store %arg8[%c0_17, %c0_18], %24 {strides = array<i32>} : memref<16x128xbf16, #tpu.memory_space<vmem>>, vector<16x128xbf16>,
    return
  }
  func.func @transform_0(%arg0: i32) -> (i32, i32) {
    %c0_i32 = arith.constant 0 : i32
    %c0_i32_0 = arith.constant 0 : i32
    return %arg0, %c0_i32 : i32, i32
  }
  func.func @transform_1(%arg0: i32) -> (i32, i32) {
    %c0_i32 = arith.constant 0 : i32
    %c0_i32_0 = arith.constant 0 : i32
    %c0_i32_1 = arith.constant 0 : i32
    return %c0_i32, %c0_i32_0 : i32, i32
  }
  func.func @transform_2(%arg0: i32) -> (i32, i32) {
    %c0_i32 = arith.constant 0 : i32
    %c0_i32_0 = arith.constant 0 : i32
    %c0_i32_1 = arith.constant 0 : i32
    return %c0_i32, %c0_i32_0 : i32, i32
  }
  func.func @transform_3(%arg0: i32) -> (i32, i32) {
    %c0_i32 = arith.constant 0 : i32
    %c0_i32_0 = arith.constant 0 : i32
    %c0_i32_1 = arith.constant 0 : i32
    return %c0_i32, %c0_i32_0 : i32, i32
  }
  func.func @transform_4(%arg0: i32) -> (i32, i32) {
    %c0_i32 = arith.constant 0 : i32
    %c0_i32_0 = arith.constant 0 : i32
    %c0_i32_1 = arith.constant 0 : i32
    return %c0_i32, %c0_i32_0 : i32, i32
  }
  func.func @transform_5(%arg0: i32) -> (i32, i32) {
    %c0_i32 = arith.constant 0 : i32
    %c0_i32_0 = arith.constant 0 : i32
    %c0_i32_1 = arith.constant 0 : i32
    return %c0_i32, %c0_i32_0 : i32, i32
  }
  func.func @transform_6(%arg0: i32) -> (i32, i32) {
    %c0_i32 = arith.constant 0 : i32
    %c0_i32_0 = arith.constant 0 : i32
    %c0_i32_1 = arith.constant 0 : i32
    return %c0_i32, %c0_i32_0 : i32, i32
  }
  func.func @transform_7(%arg0: i32) -> (i32, i32) {
    %c0_i32 = arith.constant 0 : i32
    %c0_i32_0 = arith.constant 0 : i32
    return %arg0, %c0_i32 : i32, i32
  }
}

</mosaic_0001>

<llo_original>
// kernel: tpu_custom_call.1
$region0: #{tpu_custom_call.1}
  #allocation0 [shape = 'u32[]', space=smem, size = 0x4, offset = 0x4, fixed_abs, tag = 'smem constant byte address 0x4 - core index']
  #allocation1 [shape = 'u32[144,128]{1,0:T(1,128)}', space=vmem, size = 0x12000, scoped, tag = 'internal scratch']
  %s0 = inlined_call_operand.hbm [shape: bf16[16,1024], index: 0, kind: input, shape index: {}]
  %s1 = inlined_call_operand.hbm [shape: bf16[1024,256], index: 1, kind: input, shape index: {}]
  %s2 = inlined_call_operand.vmem [shape: f32[1,256], index: 2, kind: input, shape index: {}]
  %s3 = inlined_call_operand.hbm [shape: bf16[256,128], index: 3, kind: input, shape index: {}]
  %s4 = inlined_call_operand.vmem [shape: f32[1,128], index: 4, kind: input, shape index: {}]
  %s5 = inlined_call_operand.hbm [shape: bf16[128,128], index: 5, kind: input, shape index: {}]
  %s6 = inlined_call_operand.vmem [shape: f32[1,128], index: 6, kind: input, shape index: {}]
  %s7 = inlined_call_operand.hbm [shape: bf16[16,128], index: 7, kind: output, shape index: {}]
  %s8 = sld [smem:[#allocation0]]
  $region54: #{tpu_custom_call.1} parent=0
    _
  %s10 = ssub.s32 1, %s8
  %s11 = scalar_select 0, %s10, %s8
  $region1: #{tpu_custom_call.1} parent=0
    #allocation2 [shape = 'u8[32768]{0}', space=vmem, size = 0x8000, scoped, tag = 'input window, operand 0, single buffered']
    #allocation3 [shape = 's32[1]{0}', space=sflag, size = 0x4, scoped, tag = 'scoped memory for tpu_custom_call.1']
    #allocation4 [shape = 's32[1]{0}', space=sflag, size = 0x4, scoped, tag = 'scoped memory for tpu_custom_call.1']
    #allocation5 [shape = 'u8[524288]{0}', space=vmem, size = 0x80000, scoped, tag = 'input window, operand 1, single buffered']
    #allocation6 [shape = 's32[1]{0}', space=sflag, size = 0x4, scoped, tag = 'scoped memory for tpu_custom_call.1']
    #allocation7 [shape = 'u8[65536]{0}', space=vmem, size = 0x10000, scoped, tag = 'input window, operand 3, single buffered']
    #allocation8 [shape = 'u8[32768]{0}', space=vmem, size = 0x8000, scoped, tag = 'input window, operand 5, single buffered']
    #allocation9 [shape = 's32[1]{0}', space=sflag, size = 0x4, scoped, tag = 'scoped memory for tpu_custom_call.1']
    #allocation10 [shape = 'u8[4096]{0}', space=vmem, size = 0x1000, scoped, tag = 'output window, operand 0, single buffered']
    %12 = vsyncpa [#allocation3], 0
    %13 = vsyncpa [#allocation6], 0
    %14 = vsyncpa [#allocation9], 0
    %15 = vsyncpa [#allocation4], 0
    // Predicated region
    $region2: #{tpu_custom_call.1} parent=1 // pred_check
      _
    $region3: #{tpu_custom_call.1} parent=1 // pred_check_branch
      %17 = sbr.rel (0) target = $region5
    $region4: #{tpu_custom_call.1} parent=1 // pred_region
      %s19 = ssub.s32 1024, 1024
      %20 = vsyncadd [#allocation3], %s19
      %s21 = sshll.u32 [#allocation2], 4
      %s22 = int_to_ptr.vmem [resolvable:$true] %s21
      %27 = dma.hbm_to_vmem [thread:$0]  %s0, 1024, %s22, [#allocation3], 512, 512, 32
    $region5: #{tpu_custom_call.1} parent=1 // pred_fallthru
      _
    // Predicated region
    $region6: #{tpu_custom_call.1} parent=1 // pred_check
      _
    $region7: #{tpu_custom_call.1} parent=1 // pred_check_branch
      %29 = sbr.rel (0) target = $region9
    $region8: #{tpu_custom_call.1} parent=1 // pred_region
      %s31 = ssub.s32 16384, 16384
      %32 = vsyncadd [#allocation6], %s31
      %s33 = sshll.u32 [#allocation5], 4
      %s34 = int_to_ptr.vmem [resolvable:$true] %s33
      %39 = dma.hbm_to_vmem [thread:$0]  %s1, 16384, %s34, [#allocation6], 128, 128, 8
    $region9: #{tpu_custom_call.1} parent=1 // pred_fallthru
      _
    // Predicated region
    $region10: #{tpu_custom_call.1} parent=1 // pred_check
      _
    $region11: #{tpu_custom_call.1} parent=1 // pred_check_branch
      %41 = sbr.rel (0) target = $region13
    $region12: #{tpu_custom_call.1} parent=1 // pred_region
      _
    $region13: #{tpu_custom_call.1} parent=1 // pred_fallthru
      _
    // Predicated region
    $region14: #{tpu_custom_call.1} parent=1 // pred_check
      _
    $region15: #{tpu_custom_call.1} parent=1 // pred_check_branch
      %43 = sbr.rel (0) target = $region17
    $region16: #{tpu_custom_call.1} parent=1 // pred_region
      %s45 = ssub.s32 2048, 2048
      %46 = vsyncadd [#allocation6], %s45
      %s47 = sshll.u32 [#allocation7], 4
      %s48 = int_to_ptr.vmem [resolvable:$true] %s47
      %53 = dma.hbm_to_vmem [thread:$0]  %s3, 2048, %s48, [#allocation6], 64, 64, 4
    $region17: #{tpu_custom_call.1} parent=1 // pred_fallthru
      _
    // Predicated region
    $region18: #{tpu_custom_call.1} parent=1 // pred_check
      _
    $region19: #{tpu_custom_call.1} parent=1 // pred_check_branch
      %55 = sbr.rel (0) target = $region21
    $region20: #{tpu_custom_call.1} parent=1 // pred_region
      _
    $region21: #{tpu_custom_call.1} parent=1 // pred_fallthru
      _
    // Predicated region
    $region22: #{tpu_custom_call.1} parent=1 // pred_check
      _
    $region23: #{tpu_custom_call.1} parent=1 // pred_check_branch
      %57 = sbr.rel (0) target = $region25
    $region24: #{tpu_custom_call.1} parent=1 // pred_region
      %s59 = ssub.s32 1024, 1024
      %60 = vsyncadd [#allocation9], %s59
      %s61 = sshll.u32 [#allocation8], 4
      %s62 = int_to_ptr.vmem [resolvable:$true] %s61
      %67 = dma.hbm_to_vmem [thread:$0]  %s5, 1024, %s62, [#allocation9], 64, 64, 4
    $region25: #{tpu_custom_call.1} parent=1 // pred_fallthru
      _
    // Predicated region
    $region26: #{tpu_custom_call.1} parent=1 // pred_check
      _
    $region27: #{tpu_custom_call.1} parent=1 // pred_check_branch
      %69 = sbr.rel (0) target = $region29
    $region28: #{tpu_custom_call.1} parent=1 // pred_region
      _
    $region29: #{tpu_custom_call.1} parent=1 // pred_fallthru
      _
    // Predicated region
    $region30: #{tpu_custom_call.1} parent=1 // pred_check
      _
    $region31: #{tpu_custom_call.1} parent=1 // pred_check_branch
      %71 = sbr.rel (0) target = $region33
    $region32: #{tpu_custom_call.1} parent=1 // pred_region
      %72 = dma.done [#allocation3], 1024
    $region33: #{tpu_custom_call.1} parent=1 // pred_fallthru
      _
    // Predicated region
    $region34: #{tpu_custom_call.1} parent=1 // pred_check
      _
    $region35: #{tpu_custom_call.1} parent=1 // pred_check_branch
      %74 = sbr.rel (0) target = $region37
    $region36: #{tpu_custom_call.1} parent=1 // pred_region
      %75 = dma.done [#allocation6], 16384
    $region37: #{tpu_custom_call.1} parent=1 // pred_fallthru
      _
    // Predicated region
    $region38: #{tpu_custom_call.1} parent=1 // pred_check
      _
    $region39: #{tpu_custom_call.1} parent=1 // pred_check_branch
      %77 = sbr.rel (0) target = $region41
    $region40: #{tpu_custom_call.1} parent=1 // pred_region
      %78 = dma.done [#allocation6], 2048
    $region41: #{tpu_custom_call.1} parent=1 // pred_fallthru
      _
    // Predicated region
    $region42: #{tpu_custom_call.1} parent=1 // pred_check
      _
    $region43: #{tpu_custom_call.1} parent=1 // pred_check_branch
      %80 = sbr.rel (0) target = $region45
    $region44: #{tpu_custom_call.1} parent=1 // pred_region
      %81 = dma.done [#allocation9], 1024
    $region45: #{tpu_custom_call.1} parent=1 // pred_fallthru
      _
    %v83 = vld [vmem:[#allocation2] sm:$0xff]
    %v84 = vld [vmem:[#allocation2 + $0x8] sm:$0xff]
    %v85 = vld [vmem:[#allocation2 + $0x10] sm:$0xff]
    %v86 = vld [vmem:[#allocation2 + $0x18] sm:$0xff]
    %v87 = vld [vmem:[#allocation2 + $0x20] sm:$0xff]
    %v88 = vld [vmem:[#allocation2 + $0x28] sm:$0xff]
    %v89 = vld [vmem:[#allocation2 + $0x30] sm:$0xff]
    %v90 = vld [vmem:[#allocation2 + $0x38] sm:$0xff]
    %v91 = vld [vmem:[#allocation5] sm:$0xff]
    %v92 = vld [vmem:[#allocation5 + $0x8] sm:$0xff]
    %v93 = vld [vmem:[#allocation5 + $0x10] sm:$0xff]
    %v94 = vld [vmem:[#allocation5 + $0x18] sm:$0xff]
    %v95 = vld [vmem:[#allocation5 + $0x20] sm:$0xff]
    %v96 = vld [vmem:[#allocation5 + $0x28] sm:$0xff]
    %v97 = vld [vmem:[#allocation5 + $0x30] sm:$0xff]
    %v98 = vld [vmem:[#allocation5 + $0x38] sm:$0xff]
    %v99 = vld [vmem:[#allocation5 + $0x40] sm:$0xff]
    %v100 = vld [vmem:[#allocation5 + $0x48] sm:$0xff]
    %v101 = vld [vmem:[#allocation5 + $0x50] sm:$0xff]
    %v102 = vld [vmem:[#allocation5 + $0x58] sm:$0xff]
    %v103 = vld [vmem:[#allocation5 + $0x60] sm:$0xff]
    %v104 = vld [vmem:[#allocation5 + $0x68] sm:$0xff]
    %v105 = vld [vmem:[#allocation5 + $0x70] sm:$0xff]
    %v106 = vld [vmem:[#allocation5 + $0x78] sm:$0xff]
    %v107 = vld [vmem:[#allocation5 + $0x80] sm:$0xff]
    %v108 = vld [vmem:[#allocation5 + $0x88] sm:$0xff]
    %v109 = vld [vmem:[#allocation5 + $0x90] sm:$0xff]
    %v110 = vld [vmem:[#allocation5 + $0x98] sm:$0xff]
    %v111 = vld [vmem:[#allocation5 + $0xa0] sm:$0xff]
    %v112 = vld [vmem:[#allocation5 + $0xa8] sm:$0xff]
    %v113 = vld [vmem:[#allocation5 + $0xb0] sm:$0xff]
    %v114 = vld [vmem:[#allocation5 + $0xb8] sm:$0xff]
    %v115 = vld [vmem:[#allocation5 + $0xc0] sm:$0xff]
    %v116 = vld [vmem:[#allocation5 + $0xc8] sm:$0xff]
    %v117 = vld [vmem:[#allocation5 + $0xd0] sm:$0xff]
    %v118 = vld [vmem:[#allocation5 + $0xd8] sm:$0xff]
    %v119 = vld [vmem:[#allocation5 + $0xe0] sm:$0xff]
    %v120 = vld [vmem:[#allocation5 + $0xe8] sm:$0xff]
    %v121 = vld [vmem:[#allocation5 + $0xf0] sm:$0xff]
    %v122 = vld [vmem:[#allocation5 + $0xf8] sm:$0xff]
    %v123 = vld [vmem:[#allocation5 + $0x100] sm:$0xff]
    %v124 = vld [vmem:[#allocation5 + $0x108] sm:$0xff]
    %v125 = vld [vmem:[#allocation5 + $0x110] sm:$0xff]
    %v126 = vld [vmem:[#allocation5 + $0x118] sm:$0xff]
    %v127 = vld [vmem:[#allocation5 + $0x120] sm:$0xff]
    %v128 = vld [vmem:[#allocation5 + $0x128] sm:$0xff]
    %v129 = vld [vmem:[#allocation5 + $0x130] sm:$0xff]
    %v130 = vld [vmem:[#allocation5 + $0x138] sm:$0xff]
    %v131 = vld [vmem:[#allocation5 + $0x140] sm:$0xff]
    %v132 = vld [vmem:[#allocation5 + $0x148] sm:$0xff]
    %v133 = vld [vmem:[#allocation5 + $0x150] sm:$0xff]
    %v134 = vld [vmem:[#allocation5 + $0x158] sm:$0xff]
    %v135 = vld [vmem:[#allocation5 + $0x160] sm:$0xff]
    %v136 = vld [vmem:[#allocation5 + $0x168] sm:$0xff]
    %v137 = vld [vmem:[#allocation5 + $0x170] sm:$0xff]
    %v138 = vld [vmem:[#allocation5 + $0x178] sm:$0xff]
    %v139 = vld [vmem:[#allocation5 + $0x180] sm:$0xff]
    %v140 = vld [vmem:[#allocation5 + $0x188] sm:$0xff]
    %v141 = vld [vmem:[#allocation5 + $0x190] sm:$0xff]
    %v142 = vld [vmem:[#allocation5 + $0x198] sm:$0xff]
    %v143 = vld [vmem:[#allocation5 + $0x1a0] sm:$0xff]
    %v144 = vld [vmem:[#allocation5 + $0x1a8] sm:$0xff]
    %v145 = vld [vmem:[#allocation5 + $0x1b0] sm:$0xff]
    %v146 = vld [vmem:[#allocation5 + $0x1b8] sm:$0xff]
    %v147 = vld [vmem:[#allocation5 + $0x1c0] sm:$0xff]
    %v148 = vld [vmem:[#allocation5 + $0x1c8] sm:$0xff]
    %v149 = vld [vmem:[#allocation5 + $0x1d0] sm:$0xff]
    %v150 = vld [vmem:[#allocation5 + $0x1d8] sm:$0xff]
    %v151 = vld [vmem:[#allocation5 + $0x1e0] sm:$0xff]
    %v152 = vld [vmem:[#allocation5 + $0x1e8] sm:$0xff]
    %v153 = vld [vmem:[#allocation5 + $0x1f0] sm:$0xff]
    %v154 = vld [vmem:[#allocation5 + $0x1f8] sm:$0xff]
    %v155 = vld [vmem:[#allocation5 + $0x200] sm:$0xff]
    %v156 = vld [vmem:[#allocation5 + $0x208] sm:$0xff]
    %v157 = vld [vmem:[#allocation5 + $0x210] sm:$0xff]
    %v158 = vld [vmem:[#allocation5 + $0x218] sm:$0xff]
    %v159 = vld [vmem:[#allocation5 + $0x220] sm:$0xff]
    %v160 = vld [vmem:[#allocation5 + $0x228] sm:$0xff]
    %v161 = vld [vmem:[#allocation5 + $0x230] sm:$0xff]
    %v162 = vld [vmem:[#allocation5 + $0x238] sm:$0xff]
    %v163 = vld [vmem:[#allocation5 + $0x240] sm:$0xff]
    %v164 = vld [vmem:[#allocation5 + $0x248] sm:$0xff]
    %v165 = vld [vmem:[#allocation5 + $0x250] sm:$0xff]
    %v166 = vld [vmem:[#allocation5 + $0x258] sm:$0xff]
    %v167 = vld [vmem:[#allocation5 + $0x260] sm:$0xff]
    %v168 = vld [vmem:[#allocation5 + $0x268] sm:$0xff]
    %v169 = vld [vmem:[#allocation5 + $0x270] sm:$0xff]
    %v170 = vld [vmem:[#allocation5 + $0x278] sm:$0xff]
    %v171 = vld [vmem:[#allocation5 + $0x280] sm:$0xff]
    %v172 = vld [vmem:[#allocation5 + $0x288] sm:$0xff]
    %v173 = vld [vmem:[#allocation5 + $0x290] sm:$0xff]
    %v174 = vld [vmem:[#allocation5 + $0x298] sm:$0xff]
    %v175 = vld [vmem:[#allocation5 + $0x2a0] sm:$0xff]
    %v176 = vld [vmem:[#allocation5 + $0x2a8] sm:$0xff]
    %v177 = vld [vmem:[#allocation5 + $0x2b0] sm:$0xff]
    %v178 = vld [vmem:[#allocation5 + $0x2b8] sm:$0xff]
    %v179 = vld [vmem:[#allocation5 + $0x2c0] sm:$0xff]
    %v180 = vld [vmem:[#allocation5 + $0x2c8] sm:$0xff]
    %v181 = vld [vmem:[#allocation5 + $0x2d0] sm:$0xff]
    %v182 = vld [vmem:[#allocation5 + $0x2d8] sm:$0xff]
    %v183 = vld [vmem:[#allocation5 + $0x2e0] sm:$0xff]
    %v184 = vld [vmem:[#allocation5 + $0x2e8] sm:$0xff]
    %v185 = vld [vmem:[#allocation5 + $0x2f0] sm:$0xff]
    %v186 = vld [vmem:[#allocation5 + $0x2f8] sm:$0xff]
    %v187 = vld [vmem:[#allocation5 + $0x300] sm:$0xff]
    %v188 = vld [vmem:[#allocation5 + $0x308] sm:$0xff]
    %v189 = vld [vmem:[#allocation5 + $0x310] sm:$0xff]
    %v190 = vld [vmem:[#allocation5 + $0x318] sm:$0xff]
    %v191 = vld [vmem:[#allocation5 + $0x320] sm:$0xff]
    %v192 = vld [vmem:[#allocation5 + $0x328] sm:$0xff]
    %v193 = vld [vmem:[#allocation5 + $0x330] sm:$0xff]
    %v194 = vld [vmem:[#allocation5 + $0x338] sm:$0xff]
    %v195 = vld [vmem:[#allocation5 + $0x340] sm:$0xff]
    %v196 = vld [vmem:[#allocation5 + $0x348] sm:$0xff]
    %v197 = vld [vmem:[#allocation5 + $0x350] sm:$0xff]
    %v198 = vld [vmem:[#allocation5 + $0x358] sm:$0xff]
    %v199 = vld [vmem:[#allocation5 + $0x360] sm:$0xff]
    %v200 = vld [vmem:[#allocation5 + $0x368] sm:$0xff]
    %v201 = vld [vmem:[#allocation5 + $0x370] sm:$0xff]
    %v202 = vld [vmem:[#allocation5 + $0x378] sm:$0xff]
    %v203 = vld [vmem:[#allocation5 + $0x380] sm:$0xff]
    %v204 = vld [vmem:[#allocation5 + $0x388] sm:$0xff]
    %v205 = vld [vmem:[#allocation5 + $0x390] sm:$0xff]
    %v206 = vld [vmem:[#allocation5 + $0x398] sm:$0xff]
    %v207 = vld [vmem:[#allocation5 + $0x3a0] sm:$0xff]
    %v208 = vld [vmem:[#allocation5 + $0x3a8] sm:$0xff]
    %v209 = vld [vmem:[#allocation5 + $0x3b0] sm:$0xff]
    %v210 = vld [vmem:[#allocation5 + $0x3b8] sm:$0xff]
    %v211 = vld [vmem:[#allocation5 + $0x3c0] sm:$0xff]
    %v212 = vld [vmem:[#allocation5 + $0x3c8] sm:$0xff]
    %v213 = vld [vmem:[#allocation5 + $0x3d0] sm:$0xff]
    %v214 = vld [vmem:[#allocation5 + $0x3d8] sm:$0xff]
    %v215 = vld [vmem:[#allocation5 + $0x3e0] sm:$0xff]
    %v216 = vld [vmem:[#allocation5 + $0x3e8] sm:$0xff]
    %v217 = vld [vmem:[#allocation5 + $0x3f0] sm:$0xff]
    %v218 = vld [vmem:[#allocation5 + $0x3f8] sm:$0xff]
    %v227 = vunpack.c.l.b16 %v83
    %v228 = vunpack.c.h.b16 %v83
    %v229 = vunpack.c.l.b16 %v84
    %v230 = vunpack.c.h.b16 %v84
    %v231 = vunpack.c.l.b16 %v85
    %v232 = vunpack.c.h.b16 %v85
    %v233 = vunpack.c.l.b16 %v86
    %v234 = vunpack.c.h.b16 %v86
    %v235 = vunpack.c.l.b16 %v87
    %v236 = vunpack.c.h.b16 %v87
    %v237 = vunpack.c.l.b16 %v88
    %v238 = vunpack.c.h.b16 %v88
    %v239 = vunpack.c.l.b16 %v89
    %v240 = vunpack.c.h.b16 %v89
    %v241 = vunpack.c.l.b16 %v90
    %v242 = vunpack.c.h.b16 %v90
    %v243 = vpack.c.b16 %v235, %v227
    %v244 = vpack.c.b16 %v236, %v228
    %v245 = vpack.c.b16 %v237, %v229
    %v246 = vpack.c.b16 %v238, %v230
    %v247 = vpack.c.b16 %v239, %v231
    %v248 = vpack.c.b16 %v240, %v232
    %v249 = vpack.c.b16 %v241, %v233
    %v250 = vpack.c.b16 %v242, %v234
    %v387 = vunpack.c.l.b16 %v91
    %v388 = vunpack.c.h.b16 %v91
    %v389 = vunpack.c.l.b16 %v92
    %v390 = vunpack.c.h.b16 %v92
    %v391 = vunpack.c.l.b16 %v93
    %v392 = vunpack.c.h.b16 %v93
    %v393 = vunpack.c.l.b16 %v94
    %v394 = vunpack.c.h.b16 %v94
    %v395 = vunpack.c.l.b16 %v95
    %v396 = vunpack.c.h.b16 %v95
    %v397 = vunpack.c.l.b16 %v96
    %v398 = vunpack.c.h.b16 %v96
    %v399 = vunpack.c.l.b16 %v97
    %v400 = vunpack.c.h.b16 %v97
    %v401 = vunpack.c.l.b16 %v98
    %v402 = vunpack.c.h.b16 %v98
    %v403 = vunpack.c.l.b16 %v99
    %v404 = vunpack.c.h.b16 %v99
    %v405 = vunpack.c.l.b16 %v100
    %v406 = vunpack.c.h.b16 %v100
    %v407 = vunpack.c.l.b16 %v101
    %v408 = vunpack.c.h.b16 %v101
    %v409 = vunpack.c.l.b16 %v102
    %v410 = vunpack.c.h.b16 %v102
    %v411 = vunpack.c.l.b16 %v103
    %v412 = vunpack.c.h.b16 %v103
    %v413 = vunpack.c.l.b16 %v104
    %v414 = vunpack.c.h.b16 %v104
    %v415 = vunpack.c.l.b16 %v105
    %v416 = vunpack.c.h.b16 %v105
    %v417 = vunpack.c.l.b16 %v106
    %v418 = vunpack.c.h.b16 %v106
    %v419 = vunpack.c.l.b16 %v107
    %v420 = vunpack.c.h.b16 %v107
    %v421 = vunpack.c.l.b16 %v108
    %v422 = vunpack.c.h.b16 %v108
    %v423 = vunpack.c.l.b16 %v109
    %v424 = vunpack.c.h.b16 %v109
    %v425 = vunpack.c.l.b16 %v110
    %v426 = vunpack.c.h.b16 %v110
    %v427 = vunpack.c.l.b16 %v111
    %v428 = vunpack.c.h.b16 %v111
    %v429 = vunpack.c.l.b16 %v112
    %v430 = vunpack.c.h.b16 %v112
    %v431 = vunpack.c.l.b16 %v113
    %v432 = vunpack.c.h.b16 %v113
    %v433 = vunpack.c.l.b16 %v114
    %v434 = vunpack.c.h.b16 %v114
    %v435 = vunpack.c.l.b16 %v115
    %v436 = vunpack.c.h.b16 %v115
    %v437 = vunpack.c.l.b16 %v116
    %v438 = vunpack.c.h.b16 %v116
    %v439 = vunpack.c.l.b16 %v117
    %v440 = vunpack.c.h.b16 %v117
    %v441 = vunpack.c.l.b16 %v118
    %v442 = vunpack.c.h.b16 %v118
    %v443 = vunpack.c.l.b16 %v119
    %v444 = vunpack.c.h.b16 %v119
    %v445 = vunpack.c.l.b16 %v120
    %v446 = vunpack.c.h.b16 %v120
    %v447 = vunpack.c.l.b16 %v121
    %v448 = vunpack.c.h.b16 %v121
    %v449 = vunpack.c.l.b16 %v122
    %v450 = vunpack.c.h.b16 %v122
    %v451 = vunpack.c.l.b16 %v123
    %v452 = vunpack.c.h.b16 %v123
    %v453 = vunpack.c.l.b16 %v124
    %v454 = vunpack.c.h.b16 %v124
    %v455 = vunpack.c.l.b16 %v125
    %v456 = vunpack.c.h.b16 %v125
    %v457 = vunpack.c.l.b16 %v126
    %v458 = vunpack.c.h.b16 %v126
    %v459 = vunpack.c.l.b16 %v127
    %v460 = vunpack.c.h.b16 %v127
    %v461 = vunpack.c.l.b16 %v128
    %v462 = vunpack.c.h.b16 %v128
    %v463 = vunpack.c.l.b16 %v129
    %v464 = vunpack.c.h.b16 %v129
    %v465 = vunpack.c.l.b16 %v130
    %v466 = vunpack.c.h.b16 %v130
    %v467 = vunpack.c.l.b16 %v131
    %v468 = vunpack.c.h.b16 %v131
    %v469 = vunpack.c.l.b16 %v132
    %v470 = vunpack.c.h.b16 %v132
    %v471 = vunpack.c.l.b16 %v133
    %v472 = vunpack.c.h.b16 %v133
    %v473 = vunpack.c.l.b16 %v134
    %v474 = vunpack.c.h.b16 %v134
    %v475 = vunpack.c.l.b16 %v135
    %v476 = vunpack.c.h.b16 %v135
    %v477 = vunpack.c.l.b16 %v136
    %v478 = vunpack.c.h.b16 %v136
    %v479 = vunpack.c.l.b16 %v137
    %v480 = vunpack.c.h.b16 %v137
    %v481 = vunpack.c.l.b16 %v138
    %v482 = vunpack.c.h.b16 %v138
    %v483 = vunpack.c.l.b16 %v139
    %v484 = vunpack.c.h.b16 %v139
    %v485 = vunpack.c.l.b16 %v140
    %v486 = vunpack.c.h.b16 %v140
    %v487 = vunpack.c.l.b16 %v141
    %v488 = vunpack.c.h.b16 %v141
    %v489 = vunpack.c.l.b16 %v142
    %v490 = vunpack.c.h.b16 %v142
    %v491 = vunpack.c.l.b16 %v143
    %v492 = vunpack.c.h.b16 %v143
    %v493 = vunpack.c.l.b16 %v144
    %v494 = vunpack.c.h.b16 %v144
    %v495 = vunpack.c.l.b16 %v145
    %v496 = vunpack.c.h.b16 %v145
    %v497 = vunpack.c.l.b16 %v146
    %v498 = vunpack.c.h.b16 %v146
    %v499 = vunpack.c.l.b16 %v147
    %v500 = vunpack.c.h.b16 %v147
    %v501 = vunpack.c.l.b16 %v148
    %v502 = vunpack.c.h.b16 %v148
    %v503 = vunpack.c.l.b16 %v149
    %v504 = vunpack.c.h.b16 %v149
    %v505 = vunpack.c.l.b16 %v150
    %v506 = vunpack.c.h.b16 %v150
    %v507 = vunpack.c.l.b16 %v151
    %v508 = vunpack.c.h.b16 %v151
    %v509 = vunpack.c.l.b16 %v152
    %v510 = vunpack.c.h.b16 %v152
    %v511 = vunpack.c.l.b16 %v153
    %v512 = vunpack.c.h.b16 %v153
    %v513 = vunpack.c.l.b16 %v154
    %v514 = vunpack.c.h.b16 %v154
    %v515 = vunpack.c.l.b16 %v155
    %v516 = vunpack.c.h.b16 %v155
    %v517 = vunpack.c.l.b16 %v156
    %v518 = vunpack.c.h.b16 %v156
    %v519 = vunpack.c.l.b16 %v157
    %v520 = vunpack.c.h.b16 %v157
    %v521 = vunpack.c.l.b16 %v158
    %v522 = vunpack.c.h.b16 %v158
    %v523 = vunpack.c.l.b16 %v159
    %v524 = vunpack.c.h.b16 %v159
    %v525 = vunpack.c.l.b16 %v160
    %v526 = vunpack.c.h.b16 %v160
    %v527 = vunpack.c.l.b16 %v161
    %v528 = vunpack.c.h.b16 %v161
    %v529 = vunpack.c.l.b16 %v162
    %v530 = vunpack.c.h.b16 %v162
    %v531 = vunpack.c.l.b16 %v163
    %v532 = vunpack.c.h.b16 %v163
    %v533 = vunpack.c.l.b16 %v164
    %v534 = vunpack.c.h.b16 %v164
    %v535 = vunpack.c.l.b16 %v165
    %v536 = vunpack.c.h.b16 %v165
    %v537 = vunpack.c.l.b16 %v166
    %v538 = vunpack.c.h.b16 %v166
    %v539 = vunpack.c.l.b16 %v167
    %v540 = vunpack.c.h.b16 %v167
    %v541 = vunpack.c.l.b16 %v168
    %v542 = vunpack.c.h.b16 %v168
    %v543 = vunpack.c.l.b16 %v169
    %v544 = vunpack.c.h.b16 %v169
    %v545 = vunpack.c.l.b16 %v170
    %v546 = vunpack.c.h.b16 %v170
    %v547 = vunpack.c.l.b16 %v171
    %v548 = vunpack.c.h.b16 %v171
    %v549 = vunpack.c.l.b16 %v172
    %v550 = vunpack.c.h.b16 %v172
    %v551 = vunpack.c.l.b16 %v173
    %v552 = vunpack.c.h.b16 %v173
    %v553 = vunpack.c.l.b16 %v174
    %v554 = vunpack.c.h.b16 %v174
    %v555 = vunpack.c.l.b16 %v175
    %v556 = vunpack.c.h.b16 %v175
    %v557 = vunpack.c.l.b16 %v176
    %v558 = vunpack.c.h.b16 %v176
    %v559 = vunpack.c.l.b16 %v177
    %v560 = vunpack.c.h.b16 %v177
    %v561 = vunpack.c.l.b16 %v178
    %v562 = vunpack.c.h.b16 %v178
    %v563 = vunpack.c.l.b16 %v179
    %v564 = vunpack.c.h.b16 %v179
    %v565 = vunpack.c.l.b16 %v180
    %v566 = vunpack.c.h.b16 %v180
    %v567 = vunpack.c.l.b16 %v181
    %v568 = vunpack.c.h.b16 %v181
    %v569 = vunpack.c.l.b16 %v182
    %v570 = vunpack.c.h.b16 %v182
    %v571 = vunpack.c.l.b16 %v183
    %v572 = vunpack.c.h.b16 %v183
    %v573 = vunpack.c.l.b16 %v184
    %v574 = vunpack.c.h.b16 %v184
    %v575 = vunpack.c.l.b16 %v185
    %v576 = vunpack.c.h.b16 %v185
    %v577 = vunpack.c.l.b16 %v186
    %v578 = vunpack.c.h.b16 %v186
    %v579 = vunpack.c.l.b16 %v187
    %v580 = vunpack.c.h.b16 %v187
    %v581 = vunpack.c.l.b16 %v188
    %v582 = vunpack.c.h.b16 %v188
    %v583 = vunpack.c.l.b16 %v189
    %v584 = vunpack.c.h.b16 %v189
    %v585 = vunpack.c.l.b16 %v190
    %v586 = vunpack.c.h.b16 %v190
    %v587 = vunpack.c.l.b16 %v191
    %v588 = vunpack.c.h.b16 %v191
    %v589 = vunpack.c.l.b16 %v192
    %v590 = vunpack.c.h.b16 %v192
    %v591 = vunpack.c.l.b16 %v193
    %v592 = vunpack.c.h.b16 %v193
    %v593 = vunpack.c.l.b16 %v194
    %v594 = vunpack.c.h.b16 %v194
    %v595 = vunpack.c.l.b16 %v195
    %v596 = vunpack.c.h.b16 %v195
    %v597 = vunpack.c.l.b16 %v196
    %v598 = vunpack.c.h.b16 %v196
    %v599 = vunpack.c.l.b16 %v197
    %v600 = vunpack.c.h.b16 %v197
    %v601 = vunpack.c.l.b16 %v198
    %v602 = vunpack.c.h.b16 %v198
    %v603 = vunpack.c.l.b16 %v199
    %v604 = vunpack.c.h.b16 %v199
    %v605 = vunpack.c.l.b16 %v200
    %v606 = vunpack.c.h.b16 %v200
    %v607 = vunpack.c.l.b16 %v201
    %v608 = vunpack.c.h.b16 %v201
    %v609 = vunpack.c.l.b16 %v202
    %v610 = vunpack.c.h.b16 %v202
    %v611 = vunpack.c.l.b16 %v203
    %v612 = vunpack.c.h.b16 %v203
    %v613 = vunpack.c.l.b16 %v204
    %v614 = vunpack.c.h.b16 %v204
    %v615 = vunpack.c.l.b16 %v205
    %v616 = vunpack.c.h.b16 %v205
    %v617 = vunpack.c.l.b16 %v206
    %v618 = vunpack.c.h.b16 %v206
    %v619 = vunpack.c.l.b16 %v207
    %v620 = vunpack.c.h.b16 %v207
    %v621 = vunpack.c.l.b16 %v208
    %v622 = vunpack.c.h.b16 %v208
    %v623 = vunpack.c.l.b16 %v209
    %v624 = vunpack.c.h.b16 %v209
    %v625 = vunpack.c.l.b16 %v210
    %v626 = vunpack.c.h.b16 %v210
    %v627 = vunpack.c.l.b16 %v211
    %v628 = vunpack.c.h.b16 %v211
    %v629 = vunpack.c.l.b16 %v212
    %v630 = vunpack.c.h.b16 %v212
    %v631 = vunpack.c.l.b16 %v213
    %v632 = vunpack.c.h.b16 %v213
    %v633 = vunpack.c.l.b16 %v214
    %v634 = vunpack.c.h.b16 %v214
    %v635 = vunpack.c.l.b16 %v215
    %v636 = vunpack.c.h.b16 %v215
    %v637 = vunpack.c.l.b16 %v216
    %v638 = vunpack.c.h.b16 %v216
    %v639 = vunpack.c.l.b16 %v217
    %v640 = vunpack.c.h.b16 %v217
    %v641 = vunpack.c.l.b16 %v218
    %v642 = vunpack.c.h.b16 %v218
    %v643 = vpack.c.b16 %v389, %v387
    %v644 = vpack.c.b16 %v390, %v388
    %v645 = vpack.c.b16 %v393, %v391
    %v646 = vpack.c.b16 %v394, %v392
    %v647 = vpack.c.b16 %v397, %v395
    %v648 = vpack.c.b16 %v398, %v396
    %v649 = vpack.c.b16 %v401, %v399
    %v650 = vpack.c.b16 %v402, %v400
    %v651 = vpack.c.b16 %v405, %v403
    %v652 = vpack.c.b16 %v406, %v404
    %v653 = vpack.c.b16 %v409, %v407
    %v654 = vpack.c.b16 %v410, %v408
    %v655 = vpack.c.b16 %v413, %v411
    %v656 = vpack.c.b16 %v414, %v412
    %v657 = vpack.c.b16 %v417, %v415
    %v658 = vpack.c.b16 %v418, %v416
    %v659 = vpack.c.b16 %v421, %v419
    %v660 = vpack.c.b16 %v422, %v420
    %v661 = vpack.c.b16 %v425, %v423
    %v662 = vpack.c.b16 %v426, %v424
    %v663 = vpack.c.b16 %v429, %v427
    %v664 = vpack.c.b16 %v430, %v428
    %v665 = vpack.c.b16 %v433, %v431
    %v666 = vpack.c.b16 %v434, %v432
    %v667 = vpack.c.b16 %v437, %v435
    %v668 = vpack.c.b16 %v438, %v436
    %v669 = vpack.c.b16 %v441, %v439
    %v670 = vpack.c.b16 %v442, %v440
    %v671 = vpack.c.b16 %v445, %v443
    %v672 = vpack.c.b16 %v446, %v444
    %v673 = vpack.c.b16 %v449, %v447
    %v674 = vpack.c.b16 %v450, %v448
    %v675 = vpack.c.b16 %v453, %v451
    %v676 = vpack.c.b16 %v454, %v452
    %v677 = vpack.c.b16 %v457, %v455
    %v678 = vpack.c.b16 %v458, %v456
    %v679 = vpack.c.b16 %v461, %v459
    %v680 = vpack.c.b16 %v462, %v460
    %v681 = vpack.c.b16 %v465, %v463
    %v682 = vpack.c.b16 %v466, %v464
    %v683 = vpack.c.b16 %v469, %v467
    %v684 = vpack.c.b16 %v470, %v468
    %v685 = vpack.c.b16 %v473, %v471
    %v686 = vpack.c.b16 %v474, %v472
    %v687 = vpack.c.b16 %v477, %v475
    %v688 = vpack.c.b16 %v478, %v476
    %v689 = vpack.c.b16 %v481, %v479
    %v690 = vpack.c.b16 %v482, %v480
    %v691 = vpack.c.b16 %v485, %v483
    %v692 = vpack.c.b16 %v486, %v484
    %v693 = vpack.c.b16 %v489, %v487
    %v694 = vpack.c.b16 %v490, %v488
    %v695 = vpack.c.b16 %v493, %v491
    %v696 = vpack.c.b16 %v494, %v492
    %v697 = vpack.c.b16 %v497, %v495
    %v698 = vpack.c.b16 %v498, %v496
    %v699 = vpack.c.b16 %v501, %v499
    %v700 = vpack.c.b16 %v502, %v500
    %v701 = vpack.c.b16 %v505, %v503
    %v702 = vpack.c.b16 %v506, %v504
    %v703 = vpack.c.b16 %v509, %v507
    %v704 = vpack.c.b16 %v510, %v508
    %v705 = vpack.c.b16 %v513, %v511
    %v706 = vpack.c.b16 %v514, %v512
    %v707 = vpack.c.b16 %v517, %v515
    %v708 = vpack.c.b16 %v518, %v516
    %v709 = vpack.c.b16 %v521, %v519
    %v710 = vpack.c.b16 %v522, %v520
    %v711 = vpack.c.b16 %v525, %v523
    %v712 = vpack.c.b16 %v526, %v524
    %v713 = vpack.c.b16 %v529, %v527
    %v714 = vpack.c.b16 %v530, %v528
    %v715 = vpack.c.b16 %v533, %v531
    %v716 = vpack.c.b16 %v534, %v532
    %v717 = vpack.c.b16 %v537, %v535
    %v718 = vpack.c.b16 %v538, %v536
    %v719 = vpack.c.b16 %v541, %v539
    %v720 = vpack.c.b16 %v542, %v540
    %v721 = vpack.c.b16 %v545, %v543
    %v722 = vpack.c.b16 %v546, %v544
    %v723 = vpack.c.b16 %v549, %v547
    %v724 = vpack.c.b16 %v550, %v548
    %v725 = vpack.c.b16 %v553, %v551
    %v726 = vpack.c.b16 %v554, %v552
    %v727 = vpack.c.b16 %v557, %v555
    %v728 = vpack.c.b16 %v558, %v556
    %v729 = vpack.c.b16 %v561, %v559
    %v730 = vpack.c.b16 %v562, %v560
    %v731 = vpack.c.b16 %v565, %v563
    %v732 = vpack.c.b16 %v566, %v564
    %v733 = vpack.c.b16 %v569, %v567
    %v734 = vpack.c.b16 %v570, %v568
    %v735 = vpack.c.b16 %v573, %v571
    %v736 = vpack.c.b16 %v574, %v572
    %v737 = vpack.c.b16 %v577, %v575
    %v738 = vpack.c.b16 %v578, %v576
    %v739 = vpack.c.b16 %v581, %v579
    %v740 = vpack.c.b16 %v582, %v580
    %v741 = vpack.c.b16 %v585, %v583
    %v742 = vpack.c.b16 %v586, %v584
    %v743 = vpack.c.b16 %v589, %v587
    %v744 = vpack.c.b16 %v590, %v588
    %v745 = vpack.c.b16 %v593, %v591
    %v746 = vpack.c.b16 %v594, %v592
    %v747 = vpack.c.b16 %v597, %v595
    %v748 = vpack.c.b16 %v598, %v596
    %v749 = vpack.c.b16 %v601, %v599
    %v750 = vpack.c.b16 %v602, %v600
    %v751 = vpack.c.b16 %v605, %v603
    %v752 = vpack.c.b16 %v606, %v604
    %v753 = vpack.c.b16 %v609, %v607
    %v754 = vpack.c.b16 %v610, %v608
    %v755 = vpack.c.b16 %v613, %v611
    %v756 = vpack.c.b16 %v614, %v612
    %v757 = vpack.c.b16 %v617, %v615
    %v758 = vpack.c.b16 %v618, %v616
    %v759 = vpack.c.b16 %v621, %v619
    %v760 = vpack.c.b16 %v622, %v620
    %v761 = vpack.c.b16 %v625, %v623
    %v762 = vpack.c.b16 %v626, %v624
    %v763 = vpack.c.b16 %v629, %v627
    %v764 = vpack.c.b16 %v630, %v628
    %v765 = vpack.c.b16 %v633, %v631
    %v766 = vpack.c.b16 %v634, %v632
    %v767 = vpack.c.b16 %v637, %v635
    %v768 = vpack.c.b16 %v638, %v636
    %v769 = vpack.c.b16 %v641, %v639
    %v770 = vpack.c.b16 %v642, %v640
    %899 = vmatprep.subr.bf16.mxu0 %v658
    %900 = vmatpush1.bf16.msra.mxu0 %v657
    %901 = vmatprep.subr.bf16.mxu0 %v656
    %902 = vmatpush1.bf16.msra.mxu0 %v655
    %903 = vmatprep.subr.bf16.mxu0 %v654
    %904 = vmatpush1.bf16.msra.mxu0 %v653
    %905 = vmatprep.subr.bf16.mxu0 %v652
    %906 = vmatpush1.bf16.msra.mxu0 %v651
    %907 = vmatprep.subr.bf16.mxu0 %v650
    %908 = vmatpush1.bf16.msra.mxu0 %v649
    %909 = vmatprep.subr.bf16.mxu0 %v648
    %910 = vmatpush1.bf16.msra.mxu0 %v647
    %911 = vmatprep.subr.bf16.mxu0 %v646
    %912 = vmatpush1.bf16.msra.mxu0 %v645
    %913 = vmatprep.subr.bf16.mxu0 %v644
    %914 = vmatpush1.bf16.msra.mxu0 %v643
    %915 = vmatprep.subr.bf16.mxu0 %v674
    %916 = vmatpush2.bf16.msra.mxu0 %v673
    %917 = vmatprep.subr.bf16.mxu0 %v672
    %918 = vmatpush2.bf16.msra.mxu0 %v671
    %919 = vmatprep.subr.bf16.mxu0 %v670
    %920 = vmatpush2.bf16.msra.mxu0 %v669
    %921 = vmatprep.subr.bf16.mxu0 %v668
    %922 = vmatpush2.bf16.msra.mxu0 %v667
    %923 = vmatprep.subr.bf16.mxu0 %v666
    %924 = vmatpush2.bf16.msra.mxu0 %v665
    %925 = vmatprep.subr.bf16.mxu0 %v664
    %926 = vmatpush2.bf16.msra.mxu0 %v663
    %927 = vmatprep.subr.bf16.mxu0 %v662
    %928 = vmatpush2.bf16.msra.mxu0 %v661
    %929 = vmatprep.subr.bf16.mxu0 %v660
    %930 = vmatpush2.bf16.msra.mxu0 %v659
    %931 = vmatprep.mubr.bf16.mxu0 %v244
    %932 = vmatmul.mubr.bf16.gmra.mxu0 %v243
    %v933 = vpop.f32.mrf.mxu0
    %v934 = vadd.f32 0.0, %v933
    %v935 = vpop.f32.mrf.mxu0
    %v936 = vadd.f32 0.0, %v935
    %v937 = vpop.f32.mrf.mxu0
    %v938 = vadd.f32 0.0, %v937
    %v939 = vpop.f32.mrf.mxu0
    %v940 = vadd.f32 0.0, %v939
    %941 = vdwg.mxu0
    %942 = vmatprep.subr.bf16.mxu0 %v690
    %943 = vmatpush1.bf16.msra.mxu0 %v689
    %944 = vmatprep.subr.bf16.mxu0 %v688
    %945 = vmatpush1.bf16.msra.mxu0 %v687
    %946 = vmatprep.subr.bf16.mxu0 %v686
    %947 = vmatpush1.bf16.msra.mxu0 %v685
    %948 = vmatprep.subr.bf16.mxu0 %v684
    %949 = vmatpush1.bf16.msra.mxu0 %v683
    %950 = vmatprep.subr.bf16.mxu0 %v682
    %951 = vmatpush1.bf16.msra.mxu0 %v681
    %952 = vmatprep.subr.bf16.mxu0 %v680
    %953 = vmatpush1.bf16.msra.mxu0 %v679
    %954 = vmatprep.subr.bf16.mxu0 %v678
    %955 = vmatpush1.bf16.msra.mxu0 %v677
    %956 = vmatprep.subr.bf16.mxu0 %v676
    %957 = vmatpush1.bf16.msra.mxu0 %v675
    %958 = vmatprep.subr.bf16.mxu0 %v706
    %959 = vmatpush2.bf16.msra.mxu0 %v705
    %960 = vmatprep.subr.bf16.mxu0 %v704
    %961 = vmatpush2.bf16.msra.mxu0 %v703
    %962 = vmatprep.subr.bf16.mxu0 %v702
    %963 = vmatpush2.bf16.msra.mxu0 %v701
    %964 = vmatprep.subr.bf16.mxu0 %v700
    %965 = vmatpush2.bf16.msra.mxu0 %v699
    %966 = vmatprep.subr.bf16.mxu0 %v698
    %967 = vmatpush2.bf16.msra.mxu0 %v697
    %968 = vmatprep.subr.bf16.mxu0 %v696
    %969 = vmatpush2.bf16.msra.mxu0 %v695
    %970 = vmatprep.subr.bf16.mxu0 %v694
    %971 = vmatpush2.bf16.msra.mxu0 %v693
    %972 = vmatprep.subr.bf16.mxu0 %v692
    %973 = vmatpush2.bf16.msra.mxu0 %v691
    %974 = vmatprep.mubr.bf16.mxu0 %v246
    %975 = vmatmul.mubr.bf16.gmra.mxu0 %v245
    %v976 = vpop.f32.mrf.mxu0
    %v977 = vadd.f32 %v934, %v976
    %v978 = vpop.f32.mrf.mxu0
    %v979 = vadd.f32 %v936, %v978
    %v980 = vpop.f32.mrf.mxu0
    %v981 = vadd.f32 %v938, %v980
    %v982 = vpop.f32.mrf.mxu0
    %v983 = vadd.f32 %v940, %v982
    %984 = vdwg.mxu0
    %985 = vmatprep.subr.bf16.mxu0 %v722
    %986 = vmatpush1.bf16.msra.mxu0 %v721
    %987 = vmatprep.subr.bf16.mxu0 %v720
    %988 = vmatpush1.bf16.msra.mxu0 %v719
    %989 = vmatprep.subr.bf16.mxu0 %v718
    %990 = vmatpush1.bf16.msra.mxu0 %v717
    %991 = vmatprep.subr.bf16.mxu0 %v716
    %992 = vmatpush1.bf16.msra.mxu0 %v715
    %993 = vmatprep.subr.bf16.mxu0 %v714
    %994 = vmatpush1.bf16.msra.mxu0 %v713
    %995 = vmatprep.subr.bf16.mxu0 %v712
    %996 = vmatpush1.bf16.msra.mxu0 %v711
    %997 = vmatprep.subr.bf16.mxu0 %v710
    %998 = vmatpush1.bf16.msra.mxu0 %v709
    %999 = vmatprep.subr.bf16.mxu0 %v708
    %1000 = vmatpush1.bf16.msra.mxu0 %v707
    %1001 = vmatprep.subr.bf16.mxu0 %v738
    %1002 = vmatpush2.bf16.msra.mxu0 %v737
    %1003 = vmatprep.subr.bf16.mxu0 %v736
    %1004 = vmatpush2.bf16.msra.mxu0 %v735
    %1005 = vmatprep.subr.bf16.mxu0 %v734
    %1006 = vmatpush2.bf16.msra.mxu0 %v733
    %1007 = vmatprep.subr.bf16.mxu0 %v732
    %1008 = vmatpush2.bf16.msra.mxu0 %v731
    %1009 = vmatprep.subr.bf16.mxu0 %v730
    %1010 = vmatpush2.bf16.msra.mxu0 %v729
    %1011 = vmatprep.subr.bf16.mxu0 %v728
    %1012 = vmatpush2.bf16.msra.mxu0 %v727
    %1013 = vmatprep.subr.bf16.mxu0 %v726
    %1014 = vmatpush2.bf16.msra.mxu0 %v725
    %1015 = vmatprep.subr.bf16.mxu0 %v724
    %1016 = vmatpush2.bf16.msra.mxu0 %v723
    %1017 = vmatprep.mubr.bf16.mxu0 %v248
    %1018 = vmatmul.mubr.bf16.gmra.mxu0 %v247
    %v1019 = vpop.f32.mrf.mxu0
    %v1020 = vadd.f32 %v977, %v1019
    %v1021 = vpop.f32.mrf.mxu0
    %v1022 = vadd.f32 %v979, %v1021
    %v1023 = vpop.f32.mrf.mxu0
    %v1024 = vadd.f32 %v981, %v1023
    %v1025 = vpop.f32.mrf.mxu0
    %v1026 = vadd.f32 %v983, %v1025
    %1027 = vdwg.mxu0
    %1028 = vmatprep.subr.bf16.mxu0 %v754
    %1029 = vmatpush1.bf16.msra.mxu0 %v753
    %1030 = vmatprep.subr.bf16.mxu0 %v752
    %1031 = vmatpush1.bf16.msra.mxu0 %v751
    %1032 = vmatprep.subr.bf16.mxu0 %v750
    %1033 = vmatpush1.bf16.msra.mxu0 %v749
    %1034 = vmatprep.subr.bf16.mxu0 %v748
    %1035 = vmatpush1.bf16.msra.mxu0 %v747
    %1036 = vmatprep.subr.bf16.mxu0 %v746
    %1037 = vmatpush1.bf16.msra.mxu0 %v745
    %1038 = vmatprep.subr.bf16.mxu0 %v744
    %1039 = vmatpush1.bf16.msra.mxu0 %v743
    %1040 = vmatprep.subr.bf16.mxu0 %v742
    %1041 = vmatpush1.bf16.msra.mxu0 %v741
    %1042 = vmatprep.subr.bf16.mxu0 %v740
    %1043 = vmatpush1.bf16.msra.mxu0 %v739
    %1044 = vmatprep.subr.bf16.mxu0 %v770
    %1045 = vmatpush2.bf16.msra.mxu0 %v769
    %1046 = vmatprep.subr.bf16.mxu0 %v768
    %1047 = vmatpush2.bf16.msra.mxu0 %v767
    %1048 = vmatprep.subr.bf16.mxu0 %v766
    %1049 = vmatpush2.bf16.msra.mxu0 %v765
    %1050 = vmatprep.subr.bf16.mxu0 %v764
    %1051 = vmatpush2.bf16.msra.mxu0 %v763
    %1052 = vmatprep.subr.bf16.mxu0 %v762
    %1053 = vmatpush2.bf16.msra.mxu0 %v761
    %1054 = vmatprep.subr.bf16.mxu0 %v760
    %1055 = vmatpush2.bf16.msra.mxu0 %v759
    %1056 = vmatprep.subr.bf16.mxu0 %v758
    %1057 = vmatpush2.bf16.msra.mxu0 %v757
    %1058 = vmatprep.subr.bf16.mxu0 %v756
    %1059 = vmatpush2.bf16.msra.mxu0 %v755
    %1060 = vmatprep.mubr.bf16.mxu0 %v250
    %1061 = vmatmul.mubr.bf16.gmra.mxu0 %v249
    %v1062 = vpop.f32.mrf.mxu0
    %v1063 = vadd.f32 %v1020, %v1062
    %v1064 = vpop.f32.mrf.mxu0
    %v1065 = vadd.f32 %v1022, %v1064
    %v1066 = vpop.f32.mrf.mxu0
    %v1067 = vadd.f32 %v1024, %v1066
    %v1068 = vpop.f32.mrf.mxu0
    %v1069 = vadd.f32 %v1026, %v1068
    %1070 = vdwg.mxu0
    %v1071 = vpack.c.bf16 %v1067, %v1063
    %v1072 = vpack.c.bf16 %v1069, %v1065
    %v1073 = vld [vmem:[%s2] sm:$0x3]
    %v1075 = vlaneseq
    %v1076 = vshrl.u32 %v1075, 7
    %v1077 = vsub.s32 0, %v1076
    %v1078 = vrot.slane %v1073, %v1077
    %v1079 = vlaneseq
    %v1080 = vshrl.u32 %v1079, 7
    %v1081 = vsub.s32 1, %v1080
    %v1082 = vrot.slane %v1073, %v1081
    %v1085 = vpack.c.bf16 %v1078, %v1078
    %v1086 = vpack.c.bf16 %v1082, %v1082
    %v1088 = vpack.i.b16 %v1085, %v1085
    %v1090 = vlaneseq
    %v1091 = vshrl.u32 %v1090, 7
    %v1092 = vsub.s32 0, %v1091
    %v1093 = vrot.slane %v1088, %v1092
    %v1095 = vpack.i.b16 %v1086, %v1086
    %v1097 = vlaneseq
    %v1098 = vshrl.u32 %v1097, 7
    %v1099 = vsub.s32 0, %v1098
    %v1100 = vrot.slane %v1095, %v1099
    %v1101 = vadd.bf16 %v1071, %v1093
    %v1102 = vadd.bf16 %v1072, %v1100
    %v1103 = vmax.bf16 %v1101, 0
    %v1104 = vmax.bf16 %v1102, 0
    %v1105 = vld [vmem:[#allocation7] sm:$0xf]
    %v1106 = vld [vmem:[#allocation7 + $0x4] sm:$0xf]
    %v1107 = vld [vmem:[#allocation7 + $0x8] sm:$0xf]
    %v1108 = vld [vmem:[#allocation7 + $0xc] sm:$0xf]
    %v1109 = vld [vmem:[#allocation7 + $0x10] sm:$0xf]
    %v1110 = vld [vmem:[#allocation7 + $0x14] sm:$0xf]
    %v1111 = vld [vmem:[#allocation7 + $0x18] sm:$0xf]
    %v1112 = vld [vmem:[#allocation7 + $0x1c] sm:$0xf]
    %v1113 = vld [vmem:[#allocation7 + $0x20] sm:$0xf]
    %v1114 = vld [vmem:[#allocation7 + $0x24] sm:$0xf]
    %v1115 = vld [vmem:[#allocation7 + $0x28] sm:$0xf]
    %v1116 = vld [vmem:[#allocation7 + $0x2c] sm:$0xf]
    %v1117 = vld [vmem:[#allocation7 + $0x30] sm:$0xf]
    %v1118 = vld [vmem:[#allocation7 + $0x34] sm:$0xf]
    %v1119 = vld [vmem:[#allocation7 + $0x38] sm:$0xf]
    %v1120 = vld [vmem:[#allocation7 + $0x3c] sm:$0xf]
    %v1121 = vld [vmem:[#allocation7 + $0x40] sm:$0xf]
    %v1122 = vld [vmem:[#allocation7 + $0x44] sm:$0xf]
    %v1123 = vld [vmem:[#allocation7 + $0x48] sm:$0xf]
    %v1124 = vld [vmem:[#allocation7 + $0x4c] sm:$0xf]
    %v1125 = vld [vmem:[#allocation7 + $0x50] sm:$0xf]
    %v1126 = vld [vmem:[#allocation7 + $0x54] sm:$0xf]
    %v1127 = vld [vmem:[#allocation7 + $0x58] sm:$0xf]
    %v1128 = vld [vmem:[#allocation7 + $0x5c] sm:$0xf]
    %v1129 = vld [vmem:[#allocation7 + $0x60] sm:$0xf]
    %v1130 = vld [vmem:[#allocation7 + $0x64] sm:$0xf]
    %v1131 = vld [vmem:[#allocation7 + $0x68] sm:$0xf]
    %v1132 = vld [vmem:[#allocation7 + $0x6c] sm:$0xf]
    %v1133 = vld [vmem:[#allocation7 + $0x70] sm:$0xf]
    %v1134 = vld [vmem:[#allocation7 + $0x74] sm:$0xf]
    %v1135 = vld [vmem:[#allocation7 + $0x78] sm:$0xf]
    %v1136 = vld [vmem:[#allocation7 + $0x7c] sm:$0xf]
    %v1169 = vunpack.c.l.b16 %v1105
    %v1170 = vunpack.c.l.b16 %v1106
    %v1171 = vunpack.c.l.b16 %v1107
    %v1172 = vunpack.c.l.b16 %v1108
    %v1173 = vunpack.c.l.b16 %v1109
    %v1174 = vunpack.c.l.b16 %v1110
    %v1175 = vunpack.c.l.b16 %v1111
    %v1176 = vunpack.c.l.b16 %v1112
    %v1177 = vunpack.c.l.b16 %v1113
    %v1178 = vunpack.c.l.b16 %v1114
    %v1179 = vunpack.c.l.b16 %v1115
    %v1180 = vunpack.c.l.b16 %v1116
    %v1181 = vunpack.c.l.b16 %v1117
    %v1182 = vunpack.c.l.b16 %v1118
    %v1183 = vunpack.c.l.b16 %v1119
    %v1184 = vunpack.c.l.b16 %v1120
    %v1185 = vunpack.c.l.b16 %v1121
    %v1186 = vunpack.c.l.b16 %v1122
    %v1187 = vunpack.c.l.b16 %v1123
    %v1188 = vunpack.c.l.b16 %v1124
    %v1189 = vunpack.c.l.b16 %v1125
    %v1190 = vunpack.c.l.b16 %v1126
    %v1191 = vunpack.c.l.b16 %v1127
    %v1192 = vunpack.c.l.b16 %v1128
    %v1193 = vunpack.c.l.b16 %v1129
    %v1194 = vunpack.c.l.b16 %v1130
    %v1195 = vunpack.c.l.b16 %v1131
    %v1196 = vunpack.c.l.b16 %v1132
    %v1197 = vunpack.c.l.b16 %v1133
    %v1198 = vunpack.c.l.b16 %v1134
    %v1199 = vunpack.c.l.b16 %v1135
    %v1200 = vunpack.c.l.b16 %v1136
    %v1201 = vpack.c.b16 %v1170, %v1169
    %v1202 = vpack.c.b16 %v1172, %v1171
    %v1203 = vpack.c.b16 %v1174, %v1173
    %v1204 = vpack.c.b16 %v1176, %v1175
    %v1205 = vpack.c.b16 %v1178, %v1177
    %v1206 = vpack.c.b16 %v1180, %v1179
    %v1207 = vpack.c.b16 %v1182, %v1181
    %v1208 = vpack.c.b16 %v1184, %v1183
    %v1209 = vpack.c.b16 %v1186, %v1185
    %v1210 = vpack.c.b16 %v1188, %v1187
    %v1211 = vpack.c.b16 %v1190, %v1189
    %v1212 = vpack.c.b16 %v1192, %v1191
    %v1213 = vpack.c.b16 %v1194, %v1193
    %v1214 = vpack.c.b16 %v1196, %v1195
    %v1215 = vpack.c.b16 %v1198, %v1197
    %v1216 = vpack.c.b16 %v1200, %v1199
    %1233 = vmatprep.subr.bf16.mxu0 0
    %1234 = vmatpush1.bf16.msra.mxu0 %v1208
    %1235 = vmatprep.subr.bf16.mxu0 0
    %1236 = vmatpush1.bf16.msra.mxu0 %v1207
    %1237 = vmatprep.subr.bf16.mxu0 0
    %1238 = vmatpush1.bf16.msra.mxu0 %v1206
    %1239 = vmatprep.subr.bf16.mxu0 0
    %1240 = vmatpush1.bf16.msra.mxu0 %v1205
    %1241 = vmatprep.subr.bf16.mxu0 0
    %1242 = vmatpush1.bf16.msra.mxu0 %v1204
    %1243 = vmatprep.subr.bf16.mxu0 0
    %1244 = vmatpush1.bf16.msra.mxu0 %v1203
    %1245 = vmatprep.subr.bf16.mxu0 0
    %1246 = vmatpush1.bf16.msra.mxu0 %v1202
    %1247 = vmatprep.subr.bf16.mxu0 0
    %1248 = vmatpush1.bf16.msra.mxu0 %v1201
    %1249 = vmatprep.subr.bf16.mxu0 0
    %1250 = vmatpush2.bf16.msra.mxu0 %v1216
    %1251 = vmatprep.subr.bf16.mxu0 0
    %1252 = vmatpush2.bf16.msra.mxu0 %v1215
    %1253 = vmatprep.subr.bf16.mxu0 0
    %1254 = vmatpush2.bf16.msra.mxu0 %v1214
    %1255 = vmatprep.subr.bf16.mxu0 0
    %1256 = vmatpush2.bf16.msra.mxu0 %v1213
    %1257 = vmatprep.subr.bf16.mxu0 0
    %1258 = vmatpush2.bf16.msra.mxu0 %v1212
    %1259 = vmatprep.subr.bf16.mxu0 0
    %1260 = vmatpush2.bf16.msra.mxu0 %v1211
    %1261 = vmatprep.subr.bf16.mxu0 0
    %1262 = vmatpush2.bf16.msra.mxu0 %v1210
    %1263 = vmatprep.subr.bf16.mxu0 0
    %1264 = vmatpush2.bf16.msra.mxu0 %v1209
    %1265 = vmatprep.mubr.bf16.mxu0 %v1104
    %1266 = vmatmul.mubr.bf16.gmra.mxu0 %v1103
    %v1267 = vpop.f32.mrf.mxu0
    %v1268 = vadd.f32 0.0, %v1267
    %v1269 = vpop.f32.mrf.mxu0
    %v1270 = vpop.f32.mrf.mxu0
    %v1271 = vadd.f32 0.0, %v1270
    %v1272 = vpop.f32.mrf.mxu0
    %1273 = vdwg.mxu0
    %v1274 = vpack.c.bf16 %v1271, %v1268
    %v1275 = vld [vmem:[%s4] sm:$0x1]
    %v1276 = vpack.c.bf16 %v1275, %v1275
    %v1278 = vpack.i.b16 %v1276, %v1276
    %v1280 = vlaneseq
    %v1281 = vshrl.u32 %v1280, 7
    %v1282 = vsub.s32 0, %v1281
    %v1283 = vrot.slane %v1278, %v1282
    %v1284 = vadd.bf16 %v1274, %v1283
    %v1285 = vmax.bf16 %v1284, 0
    %v1286 = vld [vmem:[#allocation8] sm:$0xf]
    %v1287 = vld [vmem:[#allocation8 + $0x4] sm:$0xf]
    %v1288 = vld [vmem:[#allocation8 + $0x8] sm:$0xf]
    %v1289 = vld [vmem:[#allocation8 + $0xc] sm:$0xf]
    %v1290 = vld [vmem:[#allocation8 + $0x10] sm:$0xf]
    %v1291 = vld [vmem:[#allocation8 + $0x14] sm:$0xf]
    %v1292 = vld [vmem:[#allocation8 + $0x18] sm:$0xf]
    %v1293 = vld [vmem:[#allocation8 + $0x1c] sm:$0xf]
    %v1294 = vld [vmem:[#allocation8 + $0x20] sm:$0xf]
    %v1295 = vld [vmem:[#allocation8 + $0x24] sm:$0xf]
    %v1296 = vld [vmem:[#allocation8 + $0x28] sm:$0xf]
    %v1297 = vld [vmem:[#allocation8 + $0x2c] sm:$0xf]
    %v1298 = vld [vmem:[#allocation8 + $0x30] sm:$0xf]
    %v1299 = vld [vmem:[#allocation8 + $0x34] sm:$0xf]
    %v1300 = vld [vmem:[#allocation8 + $0x38] sm:$0xf]
    %v1301 = vld [vmem:[#allocation8 + $0x3c] sm:$0xf]
    %v1302 = vld [vmem:[%s6] sm:$0x1]
    %v1304 = vlaneseq
    %v1305 = vshrl.u32 %v1304, 7
    %v1306 = vsub.s32 0, %v1305
    %v1307 = vrot.slane %v1302, %v1306
    %v1325 = vunpack.c.l.b16 %v1286
    %v1326 = vunpack.c.l.b16 %v1287
    %v1327 = vunpack.c.l.b16 %v1288
    %v1328 = vunpack.c.l.b16 %v1289
    %v1329 = vunpack.c.l.b16 %v1290
    %v1330 = vunpack.c.l.b16 %v1291
    %v1331 = vunpack.c.l.b16 %v1292
    %v1332 = vunpack.c.l.b16 %v1293
    %v1333 = vunpack.c.l.b16 %v1294
    %v1334 = vunpack.c.l.b16 %v1295
    %v1335 = vunpack.c.l.b16 %v1296
    %v1336 = vunpack.c.l.b16 %v1297
    %v1337 = vunpack.c.l.b16 %v1298
    %v1338 = vunpack.c.l.b16 %v1299
    %v1339 = vunpack.c.l.b16 %v1300
    %v1340 = vunpack.c.l.b16 %v1301
    %v1341 = vpack.c.b16 %v1326, %v1325
    %v1342 = vpack.c.b16 %v1328, %v1327
    %v1343 = vpack.c.b16 %v1330, %v1329
    %v1344 = vpack.c.b16 %v1332, %v1331
    %v1345 = vpack.c.b16 %v1334, %v1333
    %v1346 = vpack.c.b16 %v1336, %v1335
    %v1347 = vpack.c.b16 %v1338, %v1337
    %v1348 = vpack.c.b16 %v1340, %v1339
    %1357 = vmatprep.subr.bf16.mxu0 0
    %1358 = vmatpush1.bf16.msra.mxu0 %v1348
    %1359 = vmatprep.subr.bf16.mxu0 0
    %1360 = vmatpush1.bf16.msra.mxu0 %v1347
    %1361 = vmatprep.subr.bf16.mxu0 0
    %1362 = vmatpush1.bf16.msra.mxu0 %v1346
    %1363 = vmatprep.subr.bf16.mxu0 0
    %1364 = vmatpush1.bf16.msra.mxu0 %v1345
    %1365 = vmatprep.subr.bf16.mxu0 0
    %1366 = vmatpush1.bf16.msra.mxu0 %v1344
    %1367 = vmatprep.subr.bf16.mxu0 0
    %1368 = vmatpush1.bf16.msra.mxu0 %v1343
    %1369 = vmatprep.subr.bf16.mxu0 0
    %1370 = vmatpush1.bf16.msra.mxu0 %v1342
    %1371 = vmatprep.subr.bf16.mxu0 0
    %1372 = vmatpush1.bf16.msra.mxu0 %v1341
    %1373 = vmatprep.subr.bf16.mxu0 0
    %1374 = vmatpush2.bf16.msra.mxu0 0
    %1375 = vmatprep.subr.bf16.mxu0 0
    %1376 = vmatpush2.bf16.msra.mxu0 0
    %1377 = vmatprep.subr.bf16.mxu0 0
    %1378 = vmatpush2.bf16.msra.mxu0 0
    %1379 = vmatprep.subr.bf16.mxu0 0
    %1380 = vmatpush2.bf16.msra.mxu0 0
    %1381 = vmatprep.subr.bf16.mxu0 0
    %1382 = vmatpush2.bf16.msra.mxu0 0
    %1383 = vmatprep.subr.bf16.mxu0 0
    %1384 = vmatpush2.bf16.msra.mxu0 0
    %1385 = vmatprep.subr.bf16.mxu0 0
    %1386 = vmatpush2.bf16.msra.mxu0 0
    %1387 = vmatprep.subr.bf16.mxu0 0
    %1388 = vmatpush2.bf16.msra.mxu0 0
    %1389 = vmatprep.mubr.bf16.mxu0 0
    %1390 = vmatmul.mubr.bf16.gmra.mxu0 %v1285
    %v1391 = vpop.f32.mrf.mxu0
    %v1392 = vadd.f32 %v1307, %v1391
    %v1393 = vpop.f32.mrf.mxu0
    %v1394 = vpop.f32.mrf.mxu0
    %v1395 = vadd.f32 %v1307, %v1394
    %v1396 = vpop.f32.mrf.mxu0
    %1397 = vdwg.mxu0
    %v1398 = vpack.c.bf16 %v1395, %v1392
    %v1400 = vunpack.c.l.b16 %v1398
    %v1401 = vunpack.c.h.b16 %v1398
    %v1402 = vpack.c.b16 %v1400, %v1400
    %v1403 = vpack.c.b16 %v1401, %v1401
    %1406 = vst [vmem:[#allocation10] sm:$0xf] %v1402
    %1407 = vst [vmem:[#allocation10 + $0x4] sm:$0xf] %v1403
    // Predicated region
    $region46: #{tpu_custom_call.1} parent=1 // pred_check
      _
    $region47: #{tpu_custom_call.1} parent=1 // pred_check_branch
      %1409 = sbr.rel (0) target = $region49
    $region48: #{tpu_custom_call.1} parent=1 // pred_region
      %s1411 = ssub.s32 128, 128
      %1412 = vsyncadd [#allocation4], %s1411
      %s1413 = sshll.u32 [#allocation10], 4
      %s1414 = int_to_ptr.vmem [resolvable:$true] %s1413
      %1419 = dma.vmem_to_hbm [thread:$0]  %s1414, 128, %s7, [#allocation4], 64, 64, 4
    $region49: #{tpu_custom_call.1} parent=1 // pred_fallthru
      _
    // Predicated region
    $region50: #{tpu_custom_call.1} parent=1 // pred_check
      _
    $region51: #{tpu_custom_call.1} parent=1 // pred_check_branch
      %1421 = sbr.rel (0) target = $region53
    $region52: #{tpu_custom_call.1} parent=1 // pred_region
      %1422 = dma.done [#allocation4], 128
    $region53: #{tpu_custom_call.1} parent=1 // pred_fallthru
      _
    %1423 = vsyncpa [#allocation3], 1
    %1424 = vsyncpa [#allocation6], 1
    %1425 = vsyncpa [#allocation9], 1
    %1426 = vsyncpa [#allocation4], 1

</llo_original>
